<compile_context>
chip_gen: v5e
topology: v5e:2x2
jax: 0.10.0
libtpu: 0.0.40
codegen_flags: <defaults>
</compile_context>

<pallas_src>
import functools

import jax
import jax.numpy as jnp
from jax.experimental import pallas as pl
from jax.experimental.pallas import tpu as pltpu


# --------------------------------------------------------------------------
# Kernel 1: conv-as-matmul (transposed, lane = spatial) + bias, plus per-channel
#           pre-bias running sum / sum-of-squares accumulated over the inner grid axis.
# --------------------------------------------------------------------------
def conv_stats_kernel(a_ref, w_ref, b_ref, y_ref, sum_ref, ssq_ref):
    i = pl.program_id(1)

    @pl.when(i == 0)
    def _():
        sum_ref[...] = jnp.zeros_like(sum_ref)
        ssq_ref[...] = jnp.zeros_like(ssq_ref)

    # (c2, K) @ (K, tm) -> (c2, tm); lanes = spatial tile (dense loads & stores).
    yhat = jnp.dot(w_ref[...], a_ref[...], preferred_element_type=jnp.float32)
    y_ref[...] = yhat + b_ref[...]                       # bias only on the stored conv output
    # pre-bias per-channel statistics (lane reduction on the XLU); padded columns are zeros
    sum_ref[...] += jnp.sum(yhat, axis=1, keepdims=True)[None]
    ssq_ref[...] += jnp.sum(yhat * yhat, axis=1, keepdims=True)[None]


# --------------------------------------------------------------------------
# Kernel 2: BatchNorm (folded scale/shift) + Mish, in place, lane-dense.
# --------------------------------------------------------------------------
def bn_mish_kernel(y_ref, scale_ref, shift_ref, o_ref):
    z = y_ref[...] * scale_ref[...] + shift_ref[...]
    # Mish: z * tanh(softplus(z)) == z * p / (p + 2) with p = e*(e+2), e = exp(z).
    # Clamp exp arg at 20: for z > 20 the ratio is 1.0 in f32 (same as the reference).
    e = jnp.exp(jnp.minimum(z, 20.0))
    p = e * (e + 2.0)
    o_ref[...] = z * (p / (p + 2.0))


# --------------------------------------------------------------------------
# Wrapper
# --------------------------------------------------------------------------
def cbm_forward(x, w, b, gamma, beta, *, stride=1, pad=0, eps=1e-5, tm=512):
    """x: (N, c1, H, W) f32; w: (c2, c1, k, k); b, gamma, beta: (c2,)."""
    N, c1, H, W = x.shape
    c2, _, k, _ = w.shape
    Ho = (H + 2 * pad - k) // stride + 1
    Wo = (W + 2 * pad - k) // stride + 1
    M = N * Ho * Wo
    K = c1 * k * k
    assert tm % 128 == 0 and tm >= 128

    # ---- im2col, transposed: A^T (K, M); K order = (c1, ki, kj), M order = (n, ho, wo) ----
    # TODO(synk): a fully fused kernel could read the k*k taps directly from the padded input
    # via shifted index_maps (avoiding the k^2 x im2col materialization); kept as XLA glue here.
    xp = jnp.pad(x, ((0, 0), (0, 0), (pad, pad), (pad, pad)))
    patches = []
    for ki in range(k):
        for kj in range(k):
            patches.append(
                xp[:, :, ki:ki + stride * Ho:stride, kj:kj + stride * Wo:stride]
            )  # (N, c1, Ho, Wo)
    patches = jnp.stack(patches, axis=2)                 # (N, c1, k*k, Ho, Wo)
    a_t = patches.reshape(N, K, Ho, Wo).transpose(1, 0, 2, 3).reshape(K, M)

    w_mat = w.reshape(c2, K)                             # matches (c1, ki, kj) column order
    b_col = b.reshape(c2, 1)
    g_col = gamma.reshape(c2, 1)
    beta_col = beta.reshape(c2, 1)

    # ---- pad M (lane axis) up to a multiple of the tile; padded columns are zeros ----
    m_pad = pl.cdiv(M, tm) * tm
    if m_pad != M:
        a_t = jnp.pad(a_t, ((0, 0), (0, m_pad - M)))
    n_tiles = m_pad // tm
    P = 2 if (n_tiles >= 2 and n_tiles % 2 == 0) else 1  # v7x: split matmul pass across 2 TCs
    inner = n_tiles // P

    vmem_limit = 32 * 1024 * 1024

    # ---- kernel 1: conv matmul + bias + per-channel (pre-bias) partial stats ----
    y_t, psum, pssq = pl.pallas_call(
        conv_stats_kernel,
        out_shape=(
            jax.ShapeDtypeStruct((c2, m_pad), jnp.float32),
            jax.ShapeDtypeStruct((P, c2, 1), jnp.float32),
            jax.ShapeDtypeStruct((P, c2, 1), jnp.float32),
        ),
        grid=(P, inner),
        in_specs=[
            pl.BlockSpec((K, tm), lambda p, i: (0, p * inner + i)),
            pl.BlockSpec((c2, K), lambda p, i: (0, 0)),
            pl.BlockSpec((c2, 1), lambda p, i: (0, 0)),
        ],
        out_specs=(
            pl.BlockSpec((c2, tm), lambda p, i: (0, p * inner + i)),
            pl.BlockSpec((1, c2, 1), lambda p, i: (p, 0, 0)),   # resident per-P accumulator
            pl.BlockSpec((1, c2, 1), lambda p, i: (p, 0, 0)),   # resident per-P accumulator
        ),
        compiler_params=pltpu.CompilerParams(
            dimension_semantics=("parallel", "arbitrary"),
            vmem_limit_bytes=vmem_limit,
        ),
    )(a_t, w_mat, b_col)

    # ---- fold batch statistics into a per-channel scale/shift (tiny (c2,) XLA ops) ----
    count = jnp.float32(M)
    s = psum.sum(axis=0)                                 # (c2, 1)  sum of pre-bias conv
    ss = pssq.sum(axis=0)                                # (c2, 1)  sum of squares
    mean_hat = s / count
    var = jnp.maximum(ss / count - mean_hat * mean_hat, 0.0)   # biased var (PyTorch BN train)
    inv = jax.lax.rsqrt(var + eps)
    scale = g_col * inv
    shift = beta_col - (mean_hat + b_col) * scale        # bias folded into the mean here

    # ---- kernel 2: BN affine + Mish, in place over y_t ----
    out_t = pl.pallas_call(
        bn_mish_kernel,
        out_shape=jax.ShapeDtypeStruct((c2, m_pad), jnp.float32),
        grid=(n_tiles,),
        in_specs=[
            pl.BlockSpec((c2, tm), lambda i: (0, i)),
            pl.BlockSpec((c2, 1), lambda i: (0, 0)),
            pl.BlockSpec((c2, 1), lambda i: (0, 0)),
        ],
        out_specs=pl.BlockSpec((c2, tm), lambda i: (0, i)),
        input_output_aliases={0: 0},                     # overwrite y_t in place
        compiler_params=pltpu.CompilerParams(
            dimension_semantics=("parallel",),
            vmem_limit_bytes=vmem_limit,
        ),
    )(y_t, scale, shift)

    # back to NCHW
    out = out_t[:, :M].reshape(c2, N, Ho, Wo).transpose(1, 0, 2, 3)
    return out


# --------------------------------------------------------------------------
# Pure-JAX reference (matches PyTorch CBM in training mode)
# --------------------------------------------------------------------------
def cbm_reference(x, w, b, gamma, beta, *, stride=1, pad=0, eps=1e-5):
    y = jax.lax.conv_general_dilated(
        x, w, window_strides=(stride, stride),
        padding=[(pad, pad), (pad, pad)],
        dimension_numbers=("NCHW", "OIHW", "NCHW"),
    )
    y = y + b[None, :, None, None]
    mean = y.mean(axis=(0, 2, 3))
    var = y.var(axis=(0, 2, 3))                          # biased
    xhat = (y - mean[None, :, None, None]) * jax.lax.rsqrt(var[None, :, None, None] + eps)
    z = gamma[None, :, None, None] * xhat + beta[None, :, None, None]
    return z * jnp.tanh(jax.nn.softplus(z))


if __name__ == "__main__":
    # Small shapes consistent with CBM(c1=4, c2=8, k=3, s=1, p=1)
    N, c1, H, W = 2, 4, 16, 16
    c2, k, s, p = 8, 3, 1, 1

    key = jax.random.PRNGKey(0)
    kx, kw, kb = jax.random.split(key, 3)

    x = jax.random.normal(kx, (N, c1, H, W), dtype=jnp.float32)
    w = jax.random.normal(kw, (c2, c1, k, k), dtype=jnp.float32) * 0.1
    b = jax.random.normal(kb, (c2,), dtype=jnp.float32) * 0.1
    gamma = 1.0 + 0.1 * jnp.arange(c2, dtype=jnp.float32)
    beta = 0.01 * jnp.arange(c2, dtype=jnp.float32)
    # TODO(synk): BatchNorm running_mean/running_var momentum-buffer updates are stateful
    # training bookkeeping and not part of the forward output; omitted.

    ref = cbm_reference(x, w, b, gamma, beta, stride=s, pad=p)

    # tm=512: single-tile fast path; tm=128: multi-tile + 2-way partial-stats (megacore) path;
    # tm=384: exercises the padded spatial columns path (m_pad != M) for the stats fix.
    for tm in (512, 128, 384):
        fn = jax.jit(functools.partial(cbm_forward, stride=s, pad=p, tm=tm))
        out = jax.block_until_ready(fn(x, w, b, gamma, beta))
        assert out.shape == (N, c2, H, W)
        err = float(jnp.max(jnp.abs(out - ref)))
        assert jnp.allclose(out, ref, atol=1e-4, rtol=1e-4), f"tm={tm} max abs err {err}"

    print("KERNEL_OK")
</pallas_src>

<mosaic_0001>
module attributes {stable_mosaic.version = 11 : i64} {
  func.func @conv_stats_kernel(%arg0: i32, %arg1: i32, %arg2: memref<36x512xf32, #tpu.memory_space<vmem>>, %arg3: memref<8x36xf32, #tpu.memory_space<vmem>>, %arg4: memref<8x1xf32, #tpu.memory_space<vmem>>, %arg5: memref<8x512xf32, #tpu.memory_space<vmem>>, %arg6: memref<1x8x1xf32, #tpu.memory_space<vmem>>, %arg7: memref<1x8x1xf32, #tpu.memory_space<vmem>>) attributes {dimension_semantics = [#tpu.dimension_semantics<parallel>, #tpu.dimension_semantics<arbitrary>], iteration_bounds = array<i64: 1, 1>, scalar_prefetch = 0 : i64, scratch_operands = 0 : i64, tpu.core_type = #tpu.core_type<tc>, window_params = [{transform_indices = @transform_0, window_bounds = array<i64: 36, 512>}, {pipeline_mode = #tpu.pipeline_mode<synchronous>, transform_indices = @transform_1, window_bounds = array<i64: 8, 36>}, {pipeline_mode = #tpu.pipeline_mode<synchronous>, transform_indices = @transform_2, window_bounds = array<i64: 8, 1>}, {transform_indices = @transform_3, window_bounds = array<i64: 8, 512>}, {transform_indices = @transform_4, window_bounds = array<i64: 1, 8, 1>}, {transform_indices = @transform_5, window_bounds = array<i64: 1, 8, 1>}]} {
    %c0_i32 = arith.constant 0 : i32
    %0 = arith.cmpi eq, %arg1, %c0_i32 : i32
    %1 = arith.extui %0 : i1 to i32
    %c0_i32_0 = arith.constant 0 : i32
    %2 = arith.cmpi ne, %1, %c0_i32_0 : i32
    scf.if %2 {
      %cst_22 = arith.constant 0.000000e+00 : f32
      %23 = vector.broadcast %cst_22 : f32 to vector<1x8x1xf32>
      %c0_23 = arith.constant 0 : index
      %c0_24 = arith.constant 0 : index
      %c0_25 = arith.constant 0 : index
      %24 = vector.load %arg6[%c0_23, %c0_24, %c0_25] : memref<1x8x1xf32, #tpu.memory_space<vmem>>, vector<1x8x1xf32>
      tpu.vector_store %arg6[%c0_23, %c0_24, %c0_25], %23 {strides = array<i32>} : memref<1x8x1xf32, #tpu.memory_space<vmem>>, vector<1x8x1xf32>,
      %cst_26 = arith.constant 0.000000e+00 : f32
      %25 = vector.broadcast %cst_26 : f32 to vector<1x8x1xf32>
      %c0_27 = arith.constant 0 : index
      %c0_28 = arith.constant 0 : index
      %c0_29 = arith.constant 0 : index
      %26 = vector.load %arg7[%c0_27, %c0_28, %c0_29] : memref<1x8x1xf32, #tpu.memory_space<vmem>>, vector<1x8x1xf32>
      tpu.vector_store %arg7[%c0_27, %c0_28, %c0_29], %25 {strides = array<i32>} : memref<1x8x1xf32, #tpu.memory_space<vmem>>, vector<1x8x1xf32>,
    } else {
    }
    %c0 = arith.constant 0 : index
    %c0_1 = arith.constant 0 : index
    %3 = vector.load %arg3[%c0, %c0_1] : memref<8x36xf32, #tpu.memory_space<vmem>>, vector<8x36xf32>
    %c0_2 = arith.constant 0 : index
    %c0_3 = arith.constant 0 : index
    %4 = vector.load %arg2[%c0_2, %c0_3] : memref<36x512xf32, #tpu.memory_space<vmem>>, vector<36x512xf32>
    %cst = arith.constant dense<0.000000e+00> : vector<8x512xf32>
    %5 = tpu.matmul %3, %4, %cst {dimension_numbers = #tpu.dot_dimension_numbers<[1], [0], [0], [1], [0, 0, 1, 1], [], []>} : vector<8x36xf32>, vector<36x512xf32>, vector<8x512xf32> -> vector<8x512xf32>
    %c0_4 = arith.constant 0 : index
    %c0_5 = arith.constant 0 : index
    %6 = vector.load %arg4[%c0_4, %c0_5] : memref<8x1xf32, #tpu.memory_space<vmem>>, vector<8x1xf32>
    %7 = vector.broadcast %6 : vector<8x1xf32> to vector<8x512xf32>
    %8 = arith.addf %5, %7 : vector<8x512xf32>
    %c0_6 = arith.constant 0 : index
    %c0_7 = arith.constant 0 : index
    %9 = vector.load %arg5[%c0_6, %c0_7] : memref<8x512xf32, #tpu.memory_space<vmem>>, vector<8x512xf32>
    tpu.vector_store %arg5[%c0_6, %c0_7], %8 {strides = array<i32>} : memref<8x512xf32, #tpu.memory_space<vmem>>, vector<8x512xf32>,
    %c0_8 = arith.constant 0 : index
    %c0_9 = arith.constant 0 : index
    %c0_10 = arith.constant 0 : index
    %10 = vector.load %arg6[%c0_8, %c0_9, %c0_10] : memref<1x8x1xf32, #tpu.memory_space<vmem>>, vector<1x8x1xf32>
    %cst_11 = arith.constant dense<0.000000e+00> : vector<8xf32>
    %11 = vector.multi_reduction <add>, %5, %cst_11 [1] : vector<8x512xf32> to vector<8xf32>
    %12 = vector.shape_cast %11 : vector<8xf32> to vector<8x1xf32>
    %13 = vector.shape_cast %12 : vector<8x1xf32> to vector<1x8x1xf32>
    %14 = arith.addf %10, %13 : vector<1x8x1xf32>
    %c0_12 = arith.constant 0 : index
    %c0_13 = arith.constant 0 : index
    %c0_14 = arith.constant 0 : index
    %15 = vector.load %arg6[%c0_12, %c0_13, %c0_14] : memref<1x8x1xf32, #tpu.memory_space<vmem>>, vector<1x8x1xf32>
    tpu.vector_store %arg6[%c0_12, %c0_13, %c0_14], %14 {strides = array<i32>} : memref<1x8x1xf32, #tpu.memory_space<vmem>>, vector<1x8x1xf32>,
    %c0_15 = arith.constant 0 : index
    %c0_16 = arith.constant 0 : index
    %c0_17 = arith.constant 0 : index
    %16 = vector.load %arg7[%c0_15, %c0_16, %c0_17] : memref<1x8x1xf32, #tpu.memory_space<vmem>>, vector<1x8x1xf32>
    %17 = arith.mulf %5, %5 : vector<8x512xf32>
    %cst_18 = arith.constant dense<0.000000e+00> : vector<8xf32>
    %18 = vector.multi_reduction <add>, %17, %cst_18 [1] : vector<8x512xf32> to vector<8xf32>
    %19 = vector.shape_cast %18 : vector<8xf32> to vector<8x1xf32>
    %20 = vector.shape_cast %19 : vector<8x1xf32> to vector<1x8x1xf32>
    %21 = arith.addf %16, %20 : vector<1x8x1xf32>
    %c0_19 = arith.constant 0 : index
    %c0_20 = arith.constant 0 : index
    %c0_21 = arith.constant 0 : index
    %22 = vector.load %arg7[%c0_19, %c0_20, %c0_21] : memref<1x8x1xf32, #tpu.memory_space<vmem>>, vector<1x8x1xf32>
    tpu.vector_store %arg7[%c0_19, %c0_20, %c0_21], %21 {strides = array<i32>} : memref<1x8x1xf32, #tpu.memory_space<vmem>>, vector<1x8x1xf32>,
    return
  }
  func.func @transform_0(%arg0: i32, %arg1: i32) -> (i32, i32) {
    %c1_i32 = arith.constant 1 : i32
    %0 = arith.muli %arg0, %c1_i32 : i32
    %1 = arith.addi %0, %arg1 : i32
    %c0_i32 = arith.constant 0 : i32
    %c0_i32_0 = arith.constant 0 : i32
    return %c0_i32, %1 : i32, i32
  }
  func.func @transform_1(%arg0: i32, %arg1: i32) -> (i32, i32) {
    %c0_i32 = arith.constant 0 : i32
    %c0_i32_0 = arith.constant 0 : i32
    %c0_i32_1 = arith.constant 0 : i32
    return %c0_i32, %c0_i32_0 : i32, i32
  }
  func.func @transform_2(%arg0: i32, %arg1: i32) -> (i32, i32) {
    %c0_i32 = arith.constant 0 : i32
    %c0_i32_0 = arith.constant 0 : i32
    %c0_i32_1 = arith.constant 0 : i32
    return %c0_i32, %c0_i32_0 : i32, i32
  }
  func.func @transform_3(%arg0: i32, %arg1: i32) -> (i32, i32) {
    %c1_i32 = arith.constant 1 : i32
    %0 = arith.muli %arg0, %c1_i32 : i32
    %1 = arith.addi %0, %arg1 : i32
    %c0_i32 = arith.constant 0 : i32
    %c0_i32_0 = arith.constant 0 : i32
    return %c0_i32, %1 : i32, i32
  }
  func.func @transform_4(%arg0: i32, %arg1: i32) -> (i32, i32, i32) {
    %c0_i32 = arith.constant 0 : i32
    %c0_i32_0 = arith.constant 0 : i32
    %c0_i32_1 = arith.constant 0 : i32
    return %arg0, %c0_i32, %c0_i32_0 : i32, i32, i32
  }
  func.func @transform_5(%arg0: i32, %arg1: i32) -> (i32, i32, i32) {
    %c0_i32 = arith.constant 0 : i32
    %c0_i32_0 = arith.constant 0 : i32
    %c0_i32_1 = arith.constant 0 : i32
    return %arg0, %c0_i32, %c0_i32_0 : i32, i32, i32
  }
}

module attributes {stable_mosaic.version = 11 : i64} {
  func.func @bn_mish_kernel(%arg0: i32, %arg1: memref<8x512xf32, #tpu.memory_space<vmem>>, %arg2: memref<8x1xf32, #tpu.memory_space<vmem>>, %arg3: memref<8x1xf32, #tpu.memory_space<vmem>>, %arg4: memref<8x512xf32, #tpu.memory_space<vmem>>) attributes {dimension_semantics = [#tpu.dimension_semantics<parallel>], iteration_bounds = array<i64: 1>, scalar_prefetch = 0 : i64, scratch_operands = 0 : i64, tpu.core_type = #tpu.core_type<tc>, window_params = [{transform_indices = @transform_0, window_bounds = array<i64: 8, 512>}, {pipeline_mode = #tpu.pipeline_mode<synchronous>, transform_indices = @transform_1, window_bounds = array<i64: 8, 1>}, {pipeline_mode = #tpu.pipeline_mode<synchronous>, transform_indices = @transform_2, window_bounds = array<i64: 8, 1>}, {transform_indices = @transform_3, window_bounds = array<i64: 8, 512>}]} {
    %c0 = arith.constant 0 : index
    %c0_0 = arith.constant 0 : index
    %0 = vector.load %arg1[%c0, %c0_0] : memref<8x512xf32, #tpu.memory_space<vmem>>, vector<8x512xf32>
    %c0_1 = arith.constant 0 : index
    %c0_2 = arith.constant 0 : index
    %1 = vector.load %arg2[%c0_1, %c0_2] : memref<8x1xf32, #tpu.memory_space<vmem>>, vector<8x1xf32>
    %2 = vector.broadcast %1 : vector<8x1xf32> to vector<8x512xf32>
    %3 = arith.mulf %0, %2 : vector<8x512xf32>
    %c0_3 = arith.constant 0 : index
    %c0_4 = arith.constant 0 : index
    %4 = vector.load %arg3[%c0_3, %c0_4] : memref<8x1xf32, #tpu.memory_space<vmem>>, vector<8x1xf32>
    %5 = vector.broadcast %4 : vector<8x1xf32> to vector<8x512xf32>
    %6 = arith.addf %3, %5 : vector<8x512xf32>
    %cst = arith.constant 2.000000e+01 : f32
    %7 = vector.broadcast %cst : f32 to vector<8x512xf32>
    %8 = arith.minimumf %6, %7 : vector<8x512xf32>
    %9 = math.exp %8 : vector<8x512xf32>
    %cst_5 = arith.constant 2.000000e+00 : f32
    %10 = vector.broadcast %cst_5 : f32 to vector<8x512xf32>
    %11 = arith.addf %9, %10 : vector<8x512xf32>
    %12 = arith.mulf %9, %11 : vector<8x512xf32>
    %cst_6 = arith.constant 2.000000e+00 : f32
    %13 = vector.broadcast %cst_6 : f32 to vector<8x512xf32>
    %14 = arith.addf %12, %13 : vector<8x512xf32>
    %15 = arith.divf %12, %14 : vector<8x512xf32>
    %16 = arith.mulf %6, %15 : vector<8x512xf32>
    %c0_7 = arith.constant 0 : index
    %c0_8 = arith.constant 0 : index
    %17 = vector.load %arg4[%c0_7, %c0_8] : memref<8x512xf32, #tpu.memory_space<vmem>>, vector<8x512xf32>
    tpu.vector_store %arg4[%c0_7, %c0_8], %16 {strides = array<i32>} : memref<8x512xf32, #tpu.memory_space<vmem>>, vector<8x512xf32>,
    return
  }
  func.func @transform_0(%arg0: i32) -> (i32, i32) {
    %c0_i32 = arith.constant 0 : i32
    %c0_i32_0 = arith.constant 0 : i32
    return %c0_i32, %arg0 : i32, i32
  }
  func.func @transform_1(%arg0: i32) -> (i32, i32) {
    %c0_i32 = arith.constant 0 : i32
    %c0_i32_0 = arith.constant 0 : i32
    %c0_i32_1 = arith.constant 0 : i32
    return %c0_i32, %c0_i32_0 : i32, i32
  }
  func.func @transform_2(%arg0: i32) -> (i32, i32) {
    %c0_i32 = arith.constant 0 : i32
    %c0_i32_0 = arith.constant 0 : i32
    %c0_i32_1 = arith.constant 0 : i32
    return %c0_i32, %c0_i32_0 : i32, i32
  }
  func.func @transform_3(%arg0: i32) -> (i32, i32) {
    %c0_i32 = arith.constant 0 : i32
    %c0_i32_0 = arith.constant 0 : i32
    return %c0_i32, %arg0 : i32, i32
  }
}

</mosaic_0001>

<llo_original>
// kernel: cbm_forward.3
$region0: #{cbm_forward.3}
  #allocation0 [shape = 'u32[]', space=smem, size = 0x4, offset = 0x4, fixed_abs, tag = 'smem constant byte address 0x4 - core index']
  #allocation1 [shape = 'u32[72,128]{1,0:T(1,128)}', space=vmem, size = 0x9000, scoped, tag = 'internal scratch']
  %s0 = inlined_call_operand.vmem [shape: f32[8,512], index: 0, kind: input, shape index: {}, may-alias: {0,3}]
  %s1 = inlined_call_operand.vmem [shape: f32[8,1], index: 1, kind: input, shape index: {}]
  %s2 = inlined_call_operand.vmem [shape: f32[8,1], index: 2, kind: input, shape index: {}]
  %s3 = inlined_call_operand.vmem [shape: f32[8,512], index: 3, kind: output, shape index: {}, may-alias: {0,3}]
  %s4 = sld [smem:[#allocation0]]
  $region22: #{cbm_forward.3} parent=0
    _
  %s6 = ssub.s32 1, %s4
  %s7 = scalar_select 0, %s6, %s4
  // Predicated region
  $region2: #{cbm_forward.3} parent=0 // pred_check
    _
  $region3: #{cbm_forward.3} parent=0 // pred_check_branch
    %9 = sbr.rel (0) target = $region5
  $region4: #{cbm_forward.3} parent=0 // pred_region
    _
  $region5: #{cbm_forward.3} parent=0 // pred_fallthru
    _
  // Predicated region
  $region6: #{cbm_forward.3} parent=0 // pred_check
    _
  $region7: #{cbm_forward.3} parent=0 // pred_check_branch
    %11 = sbr.rel (0) target = $region9
  $region8: #{cbm_forward.3} parent=0 // pred_region
    _
  $region9: #{cbm_forward.3} parent=0 // pred_fallthru
    _
  // Predicated region
  $region10: #{cbm_forward.3} parent=0 // pred_check
    _
  $region11: #{cbm_forward.3} parent=0 // pred_check_branch
    %13 = sbr.rel (0) target = $region13
  $region12: #{cbm_forward.3} parent=0 // pred_region
    _
  $region13: #{cbm_forward.3} parent=0 // pred_fallthru
    _
  %v14 = vld [vmem:[%s0] sm:$0xff]
  %v15 = vld [vmem:[%s0 + $0x8] sm:$0xff]
  %v16 = vld [vmem:[%s0 + $0x10] sm:$0xff]
  %v17 = vld [vmem:[%s0 + $0x18] sm:$0xff]
  %v18 = vld [vmem:[%s1] sm:$0xff]
  %20 = vset.pattern.permute.xlu0 0
  %21 = vperm.xlu0 %20, %v18
  %v22 = vpop.permute.xlu0 %21
  %v24 = vmul.f32 %v14, %v22
  %v25 = vmul.f32 %v15, %v22
  %v26 = vmul.f32 %v16, %v22
  %v27 = vmul.f32 %v17, %v22
  %v28 = vld [vmem:[%s2] sm:$0xff]
  %30 = vset.pattern.permute.xlu0 0
  %31 = vperm.xlu0 %30, %v28
  %v32 = vpop.permute.xlu0 %31
  %v34 = vadd.f32 %v24, %v32
  %v35 = vadd.f32 %v25, %v32
  %v36 = vadd.f32 %v26, %v32
  %v37 = vadd.f32 %v27, %v32
  %v38 = vmin.f32 %v34, 20.0
  %v39 = vmin.f32 %v35, 20.0
  %v40 = vmin.f32 %v36, 20.0
  %v41 = vmin.f32 %v37, 20.0
  %v42 = vmul.f32 %v38, 1.442695
  %v43 = vpow.pop %v42
  %v44 = vmul.f32 %v39, 1.442695
  %v45 = vpow.pop %v44
  %v46 = vmul.f32 %v40, 1.442695
  %v47 = vpow.pop %v46
  %v48 = vmul.f32 %v41, 1.442695
  %v49 = vpow.pop %v48
  %v50 = vadd.f32 %v43, 2.0
  %v51 = vadd.f32 %v45, 2.0
  %v52 = vadd.f32 %v47, 2.0
  %v53 = vadd.f32 %v49, 2.0
  %v54 = vmul.f32 %v43, %v50
  %v55 = vmul.f32 %v45, %v51
  %v56 = vmul.f32 %v47, %v52
  %v57 = vmul.f32 %v49, %v53
  %v58 = vadd.f32 %v54, 2.0
  %v59 = vadd.f32 %v55, 2.0
  %v60 = vadd.f32 %v56, 2.0
  %v61 = vadd.f32 %v57, 2.0
  %v62 = vrcp.pop %v58
  %v63 = vmul.f32 %v58, %v62
  %v64 = vsub.f32 1.0, %v63
  %v65 = vmul.f32 %v62, %v64
  %v66 = vadd.f32 %v62, %v65
  %vm67 = vweird.f32 %v58
  %vm68 = vweird.f32 %v62
  %vm69 = vmor %vm67, %vm68
  %v70 = vsel %vm69, %v62, %v66
  %v71 = vand.u32 2147483647, %v58
  %vm72 = vcmp.eq.f32.partialorder %v71, 8.507059e+37
  %v73 = vand.u32 %v58, 2147483648
  %v74 = vor.u32 1.1754944e-38, %v73
  %v75 = vsel %vm72, %v74, %v70
  %v76 = vmul.f32 %v54, %v75
  %v77 = vrcp.pop %v59
  %v78 = vmul.f32 %v59, %v77
  %v79 = vsub.f32 1.0, %v78
  %v80 = vmul.f32 %v77, %v79
  %v81 = vadd.f32 %v77, %v80
  %vm82 = vweird.f32 %v59
  %vm83 = vweird.f32 %v77
  %vm84 = vmor %vm82, %vm83
  %v85 = vsel %vm84, %v77, %v81
  %v86 = vand.u32 2147483647, %v59
  %vm87 = vcmp.eq.f32.partialorder %v86, 8.507059e+37
  %v88 = vand.u32 %v59, 2147483648
  %v89 = vor.u32 1.1754944e-38, %v88
  %v90 = vsel %vm87, %v89, %v85
  %v91 = vmul.f32 %v55, %v90
  %v92 = vrcp.pop %v60
  %v93 = vmul.f32 %v60, %v92
  %v94 = vsub.f32 1.0, %v93
  %v95 = vmul.f32 %v92, %v94
  %v96 = vadd.f32 %v92, %v95
  %vm97 = vweird.f32 %v60
  %vm98 = vweird.f32 %v92
  %vm99 = vmor %vm97, %vm98
  %v100 = vsel %vm99, %v92, %v96
  %v101 = vand.u32 2147483647, %v60
  %vm102 = vcmp.eq.f32.partialorder %v101, 8.507059e+37
  %v103 = vand.u32 %v60, 2147483648
  %v104 = vor.u32 1.1754944e-38, %v103
  %v105 = vsel %vm102, %v104, %v100
  %v106 = vmul.f32 %v56, %v105
  %v107 = vrcp.pop %v61
  %v108 = vmul.f32 %v61, %v107
  %v109 = vsub.f32 1.0, %v108
  %v110 = vmul.f32 %v107, %v109
  %v111 = vadd.f32 %v107, %v110
  %vm112 = vweird.f32 %v61
  %vm113 = vweird.f32 %v107
  %vm114 = vmor %vm112, %vm113
  %v115 = vsel %vm114, %v107, %v111
  %v116 = vand.u32 2147483647, %v61
  %vm117 = vcmp.eq.f32.partialorder %v116, 8.507059e+37
  %v118 = vand.u32 %v61, 2147483648
  %v119 = vor.u32 1.1754944e-38, %v118
  %v120 = vsel %vm117, %v119, %v115
  %v121 = vmul.f32 %v57, %v120
  %v122 = vmul.f32 %v34, %v76
  %v123 = vmul.f32 %v35, %v91
  %v124 = vmul.f32 %v36, %v106
  %v125 = vmul.f32 %v37, %v121
  %126 = vst [vmem:[%s3] sm:$0xff] %v122
  %127 = vst [vmem:[%s3 + $0x8] sm:$0xff] %v123
  %128 = vst [vmem:[%s3 + $0x10] sm:$0xff] %v124
  %129 = vst [vmem:[%s3 + $0x18] sm:$0xff] %v125
  // Predicated region
  $region14: #{cbm_forward.3} parent=0 // pred_check
    _
  $region15: #{cbm_forward.3} parent=0 // pred_check_branch
    %131 = sbr.rel (0) target = $region17
  $region16: #{cbm_forward.3} parent=0 // pred_region
    _
  $region17: #{cbm_forward.3} parent=0 // pred_fallthru
    _
  // Predicated region
  $region18: #{cbm_forward.3} parent=0 // pred_check
    _
  $region19: #{cbm_forward.3} parent=0 // pred_check_branch
    %133 = sbr.rel (0) target = $region21
  $region20: #{cbm_forward.3} parent=0 // pred_region
    _
  $region21: #{cbm_forward.3} parent=0 // pred_fallthru
    _

// kernel: cbm_forward.2
$region0: #{cbm_forward.2}
  #allocation0 [shape = 'u32[]', space=smem, size = 0x4, offset = 0x4, fixed_abs, tag = 'smem constant byte address 0x4 - core index']
  #allocation1 [shape = 'u32[72,128]{1,0:T(1,128)}', space=vmem, size = 0x9000, scoped, tag = 'internal scratch']
  %s0 = inlined_call_operand.vmem [shape: f32[36,512], index: 0, kind: input, shape index: {}]
  %s1 = inlined_call_operand.vmem [shape: f32[8,36], index: 1, kind: input, shape index: {}]
  %s2 = inlined_call_operand.vmem [shape: f32[8,1], index: 2, kind: input, shape index: {}]
  %s3 = inlined_call_operand.vmem [shape: f32[8,512], index: 3, kind: output, shape index: {0}]
  %s4 = inlined_call_operand.vmem [shape: f32[1,8,1], index: 4, kind: output, shape index: {1}]
  %s5 = inlined_call_operand.vmem [shape: f32[1,8,1], index: 5, kind: output, shape index: {2}]
  %6 = xla_tuple %s3, %s4, %s5
  %s7 = sld [smem:[#allocation0]]
  $region42: #{cbm_forward.2} parent=0
    _
  %s9 = ssub.s32 1, %s7
  %s10 = scalar_select 0, %s9, %s7
  // Predicated region
  $region2: #{cbm_forward.2} parent=0 // pred_check
    _
  $region3: #{cbm_forward.2} parent=0 // pred_check_branch
    %12 = sbr.rel (0) target = $region5
  $region4: #{cbm_forward.2} parent=0 // pred_region
    %s13 = sadd.s32 0, 0
    %s14 = smul.u32 4, %s13
    %p15 = scmp.lt.s32.totalorder %s14, 3
    %s16 = scalar_select %p15, %s14, 3
    %s17 = smul.addr %s16, 8
    %s18 = scalar_lea.vmem %s0, %s17
    %s19 = sadd.s32 0, 0
    %s20 = smul.u32 4, %s19
  $region5: #{cbm_forward.2} parent=0 // pred_fallthru
    _
  // Predicated region
  $region6: #{cbm_forward.2} parent=0 // pred_check
    _
  $region7: #{cbm_forward.2} parent=0 // pred_check_branch
    %22 = sbr.rel (0) target = $region9
  $region8: #{cbm_forward.2} parent=0 // pred_region
    _
  $region9: #{cbm_forward.2} parent=0 // pred_fallthru
    _
  // Predicated region
  $region10: #{cbm_forward.2} parent=0 // pred_check
    _
  $region11: #{cbm_forward.2} parent=0 // pred_check_branch
    %24 = sbr.rel (0) target = $region13
  $region12: #{cbm_forward.2} parent=0 // pred_region
    _
  $region13: #{cbm_forward.2} parent=0 // pred_fallthru
    _
  %s25 = sadd.s32 0, 0
  %s26 = smul.u32 4, %s25
  %p27 = scmp.lt.s32.totalorder %s26, 3
  %s28 = scalar_select %p27, %s26, 3
  %s29 = smul.addr %s28, 8
  %s30 = scalar_lea.vmem %s0, %s29
  %s31 = sadd.s32 0, 0
  %s32 = smul.u32 4, %s31
  %p33 = scmp.lt.s32.totalorder %s32, 3
  %s34 = scalar_select %p33, %s32, 3
  %s35 = smul.addr %s34, 8
  %s36 = scalar_lea.vmem %s3, %s35
  %s37 = sadd.s32 0, 0
  %s38 = smul.u32 4, %s37
  %p39 = scmp.lt.s32.totalorder %s38, 3
  %s40 = scalar_select %p39, %s38, 3
  %s41 = smul.addr %s40, 8
  %s42 = scalar_lea.vmem %s0, %s41
  %s43 = sadd.s32 0, 0
  %s44 = smul.u32 4, %s43
  %s45 = sadd.s32 0, 0
  %s46 = smul.u32 4, %s45
  %p47 = scmp.lt.s32.totalorder %s46, 3
  %s48 = scalar_select %p47, %s46, 3
  %s49 = smul.addr %s48, 8
  %s50 = scalar_lea.vmem %s3, %s49
  %s51 = sadd.s32 0, 0
  %s52 = smul.u32 4, %s51
  %p53 = scmp.eq.s32.totalorder 0, 0
  // Predicated region
  $region14: #{cbm_forward.2} parent=0 // pred_check
    %p54 = pneg %p53
  $region15: #{cbm_forward.2} parent=0 // pred_check_branch
    %56 = sbr.rel (%p54) target = $region17
  $region16: #{cbm_forward.2} parent=0 // pred_region
    %vm57 = vcmask 7168
    %58 = vst.msk [vmem:[%s4] sm:$0xff] %vm57, 0.0
    %59 = vst.msk [vmem:[%s5] sm:$0xff] %vm57, 0.0
  $region17: #{cbm_forward.2} parent=0 // pred_fallthru
    _
  %v60 = vld [vmem:[%s1] sm:$0xff]
  %v61 = vld [vmem:[%s42] sm:$0xff]
  %v62 = vld [vmem:[%s42 + $0x8] sm:$0xff]
  %v63 = vld [vmem:[%s42 + $0x10] sm:$0xff]
  %v64 = vld [vmem:[%s42 + $0x18] sm:$0xff]
  %v65 = vld [vmem:[%s42 + $0x20] sm:$0xff]
  %v66 = vld [vmem:[%s42 + $0x28] sm:$0xff]
  %v67 = vld [vmem:[%s42 + $0x30] sm:$0xff]
  %v68 = vld [vmem:[%s42 + $0x38] sm:$0xff]
  %v69 = vld [vmem:[%s42 + $0x40] sm:$0xff]
  %v70 = vld [vmem:[%s42 + $0x48] sm:$0xff]
  %v71 = vld [vmem:[%s42 + $0x50] sm:$0xff]
  %v72 = vld [vmem:[%s42 + $0x58] sm:$0xff]
  %v73 = vld [vmem:[%s42 + $0x60] sm:$0xff]
  %v74 = vld [vmem:[%s42 + $0x68] sm:$0xff]
  %v75 = vld [vmem:[%s42 + $0x70] sm:$0xff]
  %v76 = vld [vmem:[%s42 + $0x78] sm:$0xff]
  %v77 = vld [vmem:[%s42 + $0x80] sm:$0xf]
  %v78 = vld [vmem:[%s42 + $0x88] sm:$0xf]
  %v79 = vld [vmem:[%s42 + $0x90] sm:$0xf]
  %v80 = vld [vmem:[%s42 + $0x98] sm:$0xf]
  %vm81 = vcmask 293888
  %v83 = vsel %vm81, %v60, 0
  %vm85 = vcmask 1043456
  %v87 = vsel %vm85, %v77, 0
  %v90 = vsel %vm85, %v78, 0
  %v93 = vsel %vm85, %v79, 0
  %v96 = vsel %vm85, %v80, 0
  %98 = vmatpush.msra.mxu0 0.0
  %99 = vmatpush.msra.mxu0 0.0
  %100 = vmatpush.msra.mxu0 0.0
  %101 = vmatpush.msra.mxu0 0.0
  %102 = vmatpush.msra.mxu0 0.0
  %103 = vmatpush.msra.mxu0 0.0
  %104 = vmatpush.msra.mxu0 0.0
  %105 = vmatpush.msra.mxu0 0.0
  %106 = vmatpush.msra.mxu0 0.0
  %107 = vmatpush.msra.mxu0 0.0
  %108 = vmatpush.msra.mxu0 0.0
  %109 = vmatpush.msra.mxu0 %v87
  %110 = vmatpush.msra.mxu0 %v73
  %111 = vmatpush.msra.mxu0 %v69
  %112 = vmatpush.msra.mxu0 %v65
  %113 = vmatpush.msra.mxu0 %v61
  %114 = vmatmul.f32.gmra.mxu0 %v83
  %v115 = vpop.f32.mrf.mxu0
  %v116 = vadd.f32 0.0, %v115
  %117 = vdwg.mxu0
  %118 = vmatpush.msra.mxu0 0.0
  %119 = vmatpush.msra.mxu0 0.0
  %120 = vmatpush.msra.mxu0 0.0
  %121 = vmatpush.msra.mxu0 0.0
  %122 = vmatpush.msra.mxu0 0.0
  %123 = vmatpush.msra.mxu0 0.0
  %124 = vmatpush.msra.mxu0 0.0
  %125 = vmatpush.msra.mxu0 0.0
  %126 = vmatpush.msra.mxu0 0.0
  %127 = vmatpush.msra.mxu0 0.0
  %128 = vmatpush.msra.mxu0 0.0
  %129 = vmatpush.msra.mxu0 %v90
  %130 = vmatpush.msra.mxu0 %v74
  %131 = vmatpush.msra.mxu0 %v70
  %132 = vmatpush.msra.mxu0 %v66
  %133 = vmatpush.msra.mxu0 %v62
  %134 = vmatmul.f32.gmra.mxu0 %v83
  %v135 = vpop.f32.mrf.mxu0
  %v136 = vadd.f32 0.0, %v135
  %137 = vdwg.mxu0
  %138 = vmatpush.msra.mxu0 0.0
  %139 = vmatpush.msra.mxu0 0.0
  %140 = vmatpush.msra.mxu0 0.0
  %141 = vmatpush.msra.mxu0 0.0
  %142 = vmatpush.msra.mxu0 0.0
  %143 = vmatpush.msra.mxu0 0.0
  %144 = vmatpush.msra.mxu0 0.0
  %145 = vmatpush.msra.mxu0 0.0
  %146 = vmatpush.msra.mxu0 0.0
  %147 = vmatpush.msra.mxu0 0.0
  %148 = vmatpush.msra.mxu0 0.0
  %149 = vmatpush.msra.mxu0 %v93
  %150 = vmatpush.msra.mxu0 %v75
  %151 = vmatpush.msra.mxu0 %v71
  %152 = vmatpush.msra.mxu0 %v67
  %153 = vmatpush.msra.mxu0 %v63
  %154 = vmatmul.f32.gmra.mxu0 %v83
  %v155 = vpop.f32.mrf.mxu0
  %v156 = vadd.f32 0.0, %v155
  %157 = vdwg.mxu0
  %158 = vmatpush.msra.mxu0 0.0
  %159 = vmatpush.msra.mxu0 0.0
  %160 = vmatpush.msra.mxu0 0.0
  %161 = vmatpush.msra.mxu0 0.0
  %162 = vmatpush.msra.mxu0 0.0
  %163 = vmatpush.msra.mxu0 0.0
  %164 = vmatpush.msra.mxu0 0.0
  %165 = vmatpush.msra.mxu0 0.0
  %166 = vmatpush.msra.mxu0 0.0
  %167 = vmatpush.msra.mxu0 0.0
  %168 = vmatpush.msra.mxu0 0.0
  %169 = vmatpush.msra.mxu0 %v96
  %170 = vmatpush.msra.mxu0 %v76
  %171 = vmatpush.msra.mxu0 %v72
  %172 = vmatpush.msra.mxu0 %v68
  %173 = vmatpush.msra.mxu0 %v64
  %174 = vmatmul.f32.gmra.mxu0 %v83
  %v175 = vpop.f32.mrf.mxu0
  %v176 = vadd.f32 0.0, %v175
  %177 = vdwg.mxu0
  %v178 = vld [vmem:[%s2] sm:$0xff]
  %180 = vset.pattern.permute.xlu0 0
  %181 = vperm.xlu0 %180, %v178
  %v182 = vpop.permute.xlu0 %181
  %v184 = vadd.f32 %v116, %v182
  %v185 = vadd.f32 %v136, %v182
  %v186 = vadd.f32 %v156, %v182
  %v187 = vadd.f32 %v176, %v182
  %188 = vst [vmem:[%s50] sm:$0xff] %v184
  %189 = vst [vmem:[%s50 + $0x8] sm:$0xff] %v185
  %190 = vst [vmem:[%s50 + $0x10] sm:$0xff] %v186
  %191 = vst [vmem:[%s50 + $0x18] sm:$0xff] %v187
  %v192 = vld [vmem:[%s4] sm:$0xff]
  %v193 = vadd.f32 %v116, %v136
  %v194 = vadd.f32 %v193, %v156
  %v195 = vadd.f32 %v194, %v176
  %196 = vadd.xlane.f32.xlu0 %v195
  %v197 = vpop.xlane.xlu0 %196
  %v198 = vadd.f32 %v192, %v197
  %vm199 = vcmask 7168
  %200 = vst.msk [vmem:[%s4] sm:$0xff] %vm199, %v198
  %v201 = vld [vmem:[%s5] sm:$0xff]
  %v202 = vmul.f32 %v116, %v116
  %v203 = vmul.f32 %v136, %v136
  %v204 = vmul.f32 %v156, %v156
  %v205 = vmul.f32 %v176, %v176
  %v206 = vadd.f32 %v202, %v203
  %v207 = vadd.f32 %v206, %v204
  %v208 = vadd.f32 %v207, %v205
  %209 = vadd.xlane.f32.xlu0 %v208
  %v210 = vpop.xlane.xlu0 %209
  %v211 = vadd.f32 %v201, %v210
  %212 = vst.msk [vmem:[%s5] sm:$0xff] %vm199, %v211
  %s213 = sadd.s32 0, 0
  %s214 = smul.u32 4, %s213
  %p215 = scmp.lt.s32.totalorder %s214, 3
  %s216 = scalar_select %p215, %s214, 3
  %s217 = smul.addr %s216, 8
  %s218 = scalar_lea.vmem %s3, %s217
  // Predicated region
  $region18: #{cbm_forward.2} parent=0 // pred_check
    _
  $region19: #{cbm_forward.2} parent=0 // pred_check_branch
    %220 = sbr.rel (0) target = $region21
  $region20: #{cbm_forward.2} parent=0 // pred_region
    %s221 = sadd.s32 0, 0
    %s222 = smul.u32 4, %s221
  $region21: #{cbm_forward.2} parent=0 // pred_fallthru
    _
  // Predicated region
  $region22: #{cbm_forward.2} parent=0 // pred_check
    _
  $region23: #{cbm_forward.2} parent=0 // pred_check_branch
    %224 = sbr.rel (0) target = $region25
  $region24: #{cbm_forward.2} parent=0 // pred_region
    _
  $region25: #{cbm_forward.2} parent=0 // pred_fallthru
    _
  // Predicated region
  $region26: #{cbm_forward.2} parent=0 // pred_check
    _
  $region27: #{cbm_forward.2} parent=0 // pred_check_branch
    %226 = sbr.rel (0) target = $region29
  $region28: #{cbm_forward.2} parent=0 // pred_region
    _
  $region29: #{cbm_forward.2} parent=0 // pred_fallthru
    _
  // Predicated region
  $region30: #{cbm_forward.2} parent=0 // pred_check
    _
  $region31: #{cbm_forward.2} parent=0 // pred_check_branch
    %228 = sbr.rel (0) target = $region33
  $region32: #{cbm_forward.2} parent=0 // pred_region
    %s229 = sadd.s32 0, 0
    %s230 = smul.u32 4, %s229
    %p231 = scmp.lt.s32.totalorder %s230, 3
    %s232 = scalar_select %p231, %s230, 3
    %s233 = smul.addr %s232, 8
    %s234 = scalar_lea.vmem %s3, %s233
  $region33: #{cbm_forward.2} parent=0 // pred_fallthru
    _
  // Predicated region
  $region34: #{cbm_forward.2} parent=0 // pred_check
    _
  $region35: #{cbm_forward.2} parent=0 // pred_check_branch
    %236 = sbr.rel (0) target = $region37
  $region36: #{cbm_forward.2} parent=0 // pred_region
    _
  $region37: #{cbm_forward.2} parent=0 // pred_fallthru
    _
  // Predicated region
  $region38: #{cbm_forward.2} parent=0 // pred_check
    _
  $region39: #{cbm_forward.2} parent=0 // pred_check_branch
    %238 = sbr.rel (0) target = $region41
  $region40: #{cbm_forward.2} parent=0 // pred_region
    _
  $region41: #{cbm_forward.2} parent=0 // pred_fallthru
    _

</llo_original>
